<compile_context>
chip_gen: v6e
topology: v6e:2x2x1
jax: 0.10.0
libtpu: 0.0.40
codegen_flags: <defaults>
</compile_context>

<pallas_src>
import jax
import jax.numpy as jnp
from jax.experimental import pallas as pl
from jax.experimental.pallas import tpu as pltpu

IN_F = 256
HID_F = 64
OUT_F = 4


def _round_up(x, m):
    return -(-x // m) * m


def node_decoder_kernel(x_ref, w1_ref, b1_ref, w2_ref, b2_ref, o_ref):
    # x arrives as f32 straight from HBM; cast to bf16 here (hidden under the
    # DMA) so the MXU runs at native bf16 rate; accumulate in f32.
    x_bf = x_ref[...].astype(jnp.bfloat16)                       # (TB, 256)

    # fc1 + bias + ReLU
    h = jnp.dot(x_bf, w1_ref[...], preferred_element_type=jnp.float32)
    h = jnp.maximum(h + b1_ref[...], 0.0)                        # (TB, 64) f32

    # fc2 + bias
    logits = jnp.dot(h.astype(jnp.bfloat16), w2_ref[...],
                     preferred_element_type=jnp.float32)         # (TB, 4) f32
    logits = logits + b2_ref[...]

    # log_softmax over the class axis (dim=1), f32 throughout.
    m = jnp.max(logits, axis=1, keepdims=True)
    shifted = logits - m
    lse = jnp.log(jnp.sum(jnp.exp(shifted), axis=1, keepdims=True))
    o_ref[...] = shifted - lse


def _pick_tb(batch, tb_max):
    """Batch-tile: multiple of 8 (sublane), capped at tb_max, chosen so the
    grid has >= 2 (preferably an even number of) steps for v7x megacore."""
    bp8 = _round_up(max(batch, 1), 8)
    if bp8 <= 8:
        return 8
    tb = min(tb_max, _round_up(-(-bp8 // 2), 8))      # at least 2 tiles
    n = -(-bp8 // tb)
    if n > 2 and n % 2 == 1:                          # nudge to an even count
        tb_even = min(tb_max, _round_up(-(-bp8 // (n + 1)), 8))
        if (-(-bp8 // tb_even)) % 2 == 0:
            tb = tb_even
    return tb


def node_decoder(x, w1, b1, w2, b2, *, tb_max=2048):
    """x: (B, 256) f32; w1: (256, 64); b1: (64,); w2: (64, 4); b2: (4,).
    Weights are [in, out] (transpose of torch nn.Linear.weight)."""
    B = x.shape[0]
    TB = _pick_tb(B, tb_max)
    grid = (pl.cdiv(B, TB),)

    # Tiny parameter casts (32 KiB total) -- negligible, kept out of the
    # per-row hot path. Biases stay f32, reshaped to 2D for TPU blocks.
    w1_bf = w1.astype(jnp.bfloat16)
    w2_bf = w2.astype(jnp.bfloat16)
    b1_f = jnp.asarray(b1, jnp.float32).reshape(1, HID_F)
    b2_f = jnp.asarray(b2, jnp.float32).reshape(1, OUT_F)

    cost = pl.CostEstimate(
        flops=B * (2 * IN_F * HID_F + 2 * HID_F * OUT_F),
        transcendentals=B * (OUT_F + 1),
        bytes_accessed=(B * IN_F * 4            # x (f32, read directly)
                        + IN_F * HID_F * 2      # w1 (bf16)
                        + HID_F * OUT_F * 2     # w2 (bf16)
                        + (HID_F + OUT_F) * 4   # biases (f32)
                        + B * OUT_F * 4),       # output (f32)
    )

    return pl.pallas_call(
        node_decoder_kernel,
        out_shape=jax.ShapeDtypeStruct((B, OUT_F), jnp.float32),
        grid=grid,
        in_specs=[
            pl.BlockSpec((TB, IN_F), lambda i: (i, 0)),      # x: tiled on batch
            pl.BlockSpec((IN_F, HID_F), lambda i: (0, 0)),   # w1: VMEM-resident
            pl.BlockSpec((1, HID_F), lambda i: (0, 0)),      # b1
            pl.BlockSpec((HID_F, OUT_F), lambda i: (0, 0)),  # w2
            pl.BlockSpec((1, OUT_F), lambda i: (0, 0)),      # b2
        ],
        out_specs=pl.BlockSpec((TB, OUT_F), lambda i: (i, 0)),
        compiler_params=pltpu.CompilerParams(
            dimension_semantics=("parallel",),               # v7x megacore
            vmem_limit_bytes=32 * 1024 * 1024),              # explicit, safe on all gens
        cost_estimate=cost,
    )(x, w1_bf, b1_f, w2_bf, b2_f)


def _ref_f32(x, w1, b1, w2, b2):
    h = jnp.maximum(x @ w1 + b1.reshape(1, -1), 0.0)
    logits = h @ w2 + b2.reshape(1, -1)
    return jax.nn.log_softmax(logits, axis=1)


def _ref_bf16(x, w1, b1, w2, b2):
    # Same bf16-operand / f32-accumulate math as the kernel.
    h = jnp.dot(x.astype(jnp.bfloat16), w1.astype(jnp.bfloat16),
                preferred_element_type=jnp.float32)
    h = jnp.maximum(h + b1.reshape(1, -1), 0.0)
    logits = jnp.dot(h.astype(jnp.bfloat16), w2.astype(jnp.bfloat16),
                     preferred_element_type=jnp.float32) + b2.reshape(1, -1)
    return jax.nn.log_softmax(logits, axis=1)


if __name__ == "__main__":
    key = jax.random.PRNGKey(0)
    k_x, k_w1, k_b1, k_w2, k_b2 = jax.random.split(key, 5)

    # B=10: not a multiple of 8, so the grid is ragged (2 steps, masked edge
    # block) -- exercises the no-pad path and the >=2-step megacore grid.
    B = 10
    x = jax.random.normal(k_x, (B, IN_F), dtype=jnp.float32)

    # PyTorch-style uniform fan-in init (weights already in [in, out] layout).
    bound1 = 1.0 / jnp.sqrt(float(IN_F))
    w1 = jax.random.uniform(k_w1, (IN_F, HID_F), jnp.float32, -bound1, bound1)
    b1 = jax.random.uniform(k_b1, (HID_F,), jnp.float32, -bound1, bound1)
    bound2 = 1.0 / jnp.sqrt(float(HID_F))
    w2 = jax.random.uniform(k_w2, (HID_F, OUT_F), jnp.float32, -bound2, bound2)
    b2 = jax.random.uniform(k_b2, (OUT_F,), jnp.float32, -bound2, bound2)

    out = node_decoder(x, w1, b1, w2, b2)
    out = jax.block_until_ready(out)
    assert out.shape == (B, OUT_F)
    assert bool(jnp.all(jnp.isfinite(out)))

    # Tight check vs. a reference using identical bf16-operand math.
    ref_bf = _ref_bf16(x, w1, b1, w2, b2)
    assert jnp.allclose(out, ref_bf, atol=1e-3, rtol=1e-3), (
        jnp.max(jnp.abs(out - ref_bf)))

    # Loose check vs. the pure f32 reference (bf16 operand rounding).
    ref_f32 = _ref_f32(x, w1, b1, w2, b2)
    assert jnp.allclose(out, ref_f32, atol=2e-2, rtol=2e-2), (
        jnp.max(jnp.abs(out - ref_f32)))

    print("KERNEL_OK")
</pallas_src>

<mosaic_0001>
module attributes {stable_mosaic.version = 11 : i64} {
  func.func @node_decoder_kernel(%arg0: i32, %arg1: memref<8x256xf32, #tpu.memory_space<vmem>>, %arg2: memref<256x64xbf16, #tpu.memory_space<vmem>>, %arg3: memref<1x64xf32, #tpu.memory_space<vmem>>, %arg4: memref<64x4xbf16, #tpu.memory_space<vmem>>, %arg5: memref<1x4xf32, #tpu.memory_space<vmem>>, %arg6: memref<8x4xf32, #tpu.memory_space<vmem>>) attributes {dimension_semantics = [#tpu.dimension_semantics<parallel>], iteration_bounds = array<i64: 2>, scalar_prefetch = 0 : i64, scratch_operands = 0 : i64, tpu.core_type = #tpu.core_type<tc>, window_params = [{transform_indices = @transform_0, window_bounds = array<i64: 8, 256>}, {pipeline_mode = #tpu.pipeline_mode<synchronous>, transform_indices = @transform_1, window_bounds = array<i64: 256, 64>}, {pipeline_mode = #tpu.pipeline_mode<synchronous>, transform_indices = @transform_2, window_bounds = array<i64: 1, 64>}, {pipeline_mode = #tpu.pipeline_mode<synchronous>, transform_indices = @transform_3, window_bounds = array<i64: 64, 4>}, {pipeline_mode = #tpu.pipeline_mode<synchronous>, transform_indices = @transform_4, window_bounds = array<i64: 1, 4>}, {transform_indices = @transform_5, window_bounds = array<i64: 8, 4>}]} {
    %c0 = arith.constant 0 : index
    %c0_0 = arith.constant 0 : index
    %0 = vector.load %arg1[%c0, %c0_0] : memref<8x256xf32, #tpu.memory_space<vmem>>, vector<8x256xf32>
    %1 = arith.truncf %0 : vector<8x256xf32> to vector<8x256xbf16>
    %c0_1 = arith.constant 0 : index
    %c0_2 = arith.constant 0 : index
    %2 = vector.load %arg2[%c0_1, %c0_2] : memref<256x64xbf16, #tpu.memory_space<vmem>>, vector<256x64xbf16>
    %cst = arith.constant dense<0.000000e+00> : vector<8x64xf32>
    %3 = tpu.matmul %1, %2, %cst {dimension_numbers = #tpu.dot_dimension_numbers<[1], [0], [0], [1], [0, 0, 1, 1], [], []>} : vector<8x256xbf16>, vector<256x64xbf16>, vector<8x64xf32> -> vector<8x64xf32>
    %c0_3 = arith.constant 0 : index
    %c0_4 = arith.constant 0 : index
    %4 = vector.load %arg3[%c0_3, %c0_4] : memref<1x64xf32, #tpu.memory_space<vmem>>, vector<1x64xf32>
    %5 = vector.broadcast %4 : vector<1x64xf32> to vector<8x64xf32>
    %6 = arith.addf %3, %5 : vector<8x64xf32>
    %cst_5 = arith.constant 0.000000e+00 : f32
    %7 = vector.broadcast %cst_5 : f32 to vector<8x64xf32>
    %8 = arith.maximumf %6, %7 : vector<8x64xf32>
    %9 = arith.truncf %8 : vector<8x64xf32> to vector<8x64xbf16>
    %c0_6 = arith.constant 0 : index
    %c0_7 = arith.constant 0 : index
    %10 = vector.load %arg4[%c0_6, %c0_7] : memref<64x4xbf16, #tpu.memory_space<vmem>>, vector<64x4xbf16>
    %cst_8 = arith.constant dense<0.000000e+00> : vector<8x4xf32>
    %11 = tpu.matmul %9, %10, %cst_8 {dimension_numbers = #tpu.dot_dimension_numbers<[1], [0], [0], [1], [0, 0, 1, 1], [], []>} : vector<8x64xbf16>, vector<64x4xbf16>, vector<8x4xf32> -> vector<8x4xf32>
    %c0_9 = arith.constant 0 : index
    %c0_10 = arith.constant 0 : index
    %12 = vector.load %arg5[%c0_9, %c0_10] : memref<1x4xf32, #tpu.memory_space<vmem>>, vector<1x4xf32>
    %13 = vector.broadcast %12 : vector<1x4xf32> to vector<8x4xf32>
    %14 = arith.addf %11, %13 : vector<8x4xf32>
    %cst_11 = arith.constant dense<0xFF800000> : vector<8xf32>
    %15 = vector.multi_reduction <maximumf>, %14, %cst_11 [1] : vector<8x4xf32> to vector<8xf32>
    %16 = vector.shape_cast %15 : vector<8xf32> to vector<8x1xf32>
    %17 = vector.broadcast %16 : vector<8x1xf32> to vector<8x4xf32>
    %18 = arith.subf %14, %17 : vector<8x4xf32>
    %19 = math.exp %18 : vector<8x4xf32>
    %cst_12 = arith.constant dense<0.000000e+00> : vector<8xf32>
    %20 = vector.multi_reduction <add>, %19, %cst_12 [1] : vector<8x4xf32> to vector<8xf32>
    %21 = vector.shape_cast %20 : vector<8xf32> to vector<8x1xf32>
    %22 = math.log %21 : vector<8x1xf32>
    %23 = vector.broadcast %22 : vector<8x1xf32> to vector<8x4xf32>
    %24 = arith.subf %18, %23 : vector<8x4xf32>
    %c0_13 = arith.constant 0 : index
    %c0_14 = arith.constant 0 : index
    %25 = vector.load %arg6[%c0_13, %c0_14] : memref<8x4xf32, #tpu.memory_space<vmem>>, vector<8x4xf32>
    tpu.vector_store %arg6[%c0_13, %c0_14], %24 {strides = array<i32>} : memref<8x4xf32, #tpu.memory_space<vmem>>, vector<8x4xf32>,
    return
  }
  func.func @transform_0(%arg0: i32) -> (i32, i32) {
    %c0_i32 = arith.constant 0 : i32
    %c0_i32_0 = arith.constant 0 : i32
    return %arg0, %c0_i32 : i32, i32
  }
  func.func @transform_1(%arg0: i32) -> (i32, i32) {
    %c0_i32 = arith.constant 0 : i32
    %c0_i32_0 = arith.constant 0 : i32
    %c0_i32_1 = arith.constant 0 : i32
    return %c0_i32, %c0_i32_0 : i32, i32
  }
  func.func @transform_2(%arg0: i32) -> (i32, i32) {
    %c0_i32 = arith.constant 0 : i32
    %c0_i32_0 = arith.constant 0 : i32
    %c0_i32_1 = arith.constant 0 : i32
    return %c0_i32, %c0_i32_0 : i32, i32
  }
  func.func @transform_3(%arg0: i32) -> (i32, i32) {
    %c0_i32 = arith.constant 0 : i32
    %c0_i32_0 = arith.constant 0 : i32
    %c0_i32_1 = arith.constant 0 : i32
    return %c0_i32, %c0_i32_0 : i32, i32
  }
  func.func @transform_4(%arg0: i32) -> (i32, i32) {
    %c0_i32 = arith.constant 0 : i32
    %c0_i32_0 = arith.constant 0 : i32
    %c0_i32_1 = arith.constant 0 : i32
    return %c0_i32, %c0_i32_0 : i32, i32
  }
  func.func @transform_5(%arg0: i32) -> (i32, i32) {
    %c0_i32 = arith.constant 0 : i32
    %c0_i32_0 = arith.constant 0 : i32
    return %arg0, %c0_i32 : i32, i32
  }
}

</mosaic_0001>

<llo_original>
// kernel: tpu_custom_call.1
$region0: #{tpu_custom_call.1}
  #allocation0 [shape = 'u32[]', space=smem, size = 0x4, offset = 0x4, fixed_abs, tag = 'smem constant byte address 0x4 - core index']
  #allocation1 [shape = 'u32[144,128]{1,0:T(1,128)}', space=vmem, size = 0x12000, scoped, tag = 'internal scratch']
  %s0 = inlined_call_operand.vmem [shape: f32[10,256], index: 0, kind: input, shape index: {}]
  %s1 = inlined_call_operand.vmem [shape: bf16[256,64], index: 1, kind: input, shape index: {}]
  %s2 = inlined_call_operand.vmem [shape: f32[1,64], index: 2, kind: input, shape index: {}]
  %s3 = inlined_call_operand.vmem [shape: bf16[64,4], index: 3, kind: input, shape index: {}]
  %s4 = inlined_call_operand.vmem [shape: f32[1,4], index: 4, kind: input, shape index: {}]
  %s5 = inlined_call_operand.vmem [shape: f32[10,4], index: 5, kind: output, shape index: {}]
  %s6 = sld [smem:[#allocation0]]
  $region53: #{tpu_custom_call.1} parent=0
    _
  %s8 = ssub.s32 1, %s6
  %s9 = scalar_select 0, %s8, %s6
  loop: start=0, step=1, limit=4
  $region2: #{tpu_custom_call.1} parent=0 // loop_pre_header
    _
  $region3: #{tpu_custom_call.1} parent=0 // loop_header
    %s11 = sphi 0, %s15
    %p12 = scmp.ge.s32.totalorder %s11, 4
    %s21 = sphi 0, %s23
    %s24 = sphi 0, %s21
    %s25 = sphi 0, %s24
    %s41 = sphi 0, %s25
    %s45 = sphi 0, %s45
    %s47 = sphi 0, %s45
    %s48 = sphi 0, %s47
    %s62 = sphi 0, %s48
    %s66 = sphi 0, %s66
    %s68 = sphi 0, %s66
    %s69 = sphi 0, %s68
    %s83 = sphi 0, %s69
    %s87 = sphi 0, %s87
    %s89 = sphi 0, %s87
    %s90 = sphi 0, %s89
    %s104 = sphi 0, %s90
    %s108 = sphi 0, %s108
    %s110 = sphi 0, %s108
    %s111 = sphi 0, %s110
    %s125 = sphi 0, %s111
    %s131 = sphi 0, %s133
    %s134 = sphi 0, %s131
    %s135 = sphi 0, %s134
    %s151 = sphi 0, %s135
  $region4: #{tpu_custom_call.1} parent=0 // loop_header_branch
    %14 = sbr.rel (%p12) target = $region8
  $region5: #{tpu_custom_call.1} parent=0 // loop_body
    %s16 = ssub.s32 %s11, 1
    %s17 = ssub.s32 %s11, 2
    %s18 = sadd.s32 %s11, 1
    %s19 = ssub.s32 %s11, %s18
    %p20 = scmp.eq.s32.totalorder %s19, 0
    %s22 = sadd.s32 %s21, 1
    %s23 = scalar_select %p20, %s21, %s22
    %p26 = pneg %p20
    %p27 = scmp.eq.s32.totalorder %s11, 1
    %p28 = por %p26, %p27
    %p29 = scmp.ne.s32.totalorder %s21, %s24
    %p30 = scmp.eq.s32.totalorder %s11, 0
    %p31 = por %p29, %p30
    %p32 = scmp.ne.s32.totalorder %s21, %s24
    %p33 = scmp.eq.s32.totalorder %s16, 1
    %p34 = por %p32, %p33
    %p35 = scmp.ne.s32.totalorder %s24, %s25
    %p36 = scmp.eq.s32.totalorder %s16, 0
    %p37 = por %p35, %p36
    %p38 = scmp.ne.s32.totalorder %s24, %s25
    %p39 = scmp.eq.s32.totalorder %s17, 1
    %p40 = por %p38, %p39
    %p42 = scmp.ne.s32.totalorder %s25, %s41
    %p43 = scmp.eq.s32.totalorder %s17, 0
    %p44 = por %p42, %p43
    %s46 = sadd.s32 %s45, 1
    %p49 = scmp.eq.s32.totalorder %s11, 1
    %p50 = scmp.ne.s32.totalorder %s45, %s47
    %p51 = scmp.eq.s32.totalorder %s11, 0
    %p52 = por %p50, %p51
    %p53 = scmp.ne.s32.totalorder %s45, %s47
    %p54 = scmp.eq.s32.totalorder %s16, 1
    %p55 = por %p53, %p54
    %p56 = scmp.ne.s32.totalorder %s47, %s48
    %p57 = scmp.eq.s32.totalorder %s16, 0
    %p58 = por %p56, %p57
    %p59 = scmp.ne.s32.totalorder %s47, %s48
    %p60 = scmp.eq.s32.totalorder %s17, 1
    %p61 = por %p59, %p60
    %p63 = scmp.ne.s32.totalorder %s48, %s62
    %p64 = scmp.eq.s32.totalorder %s17, 0
    %p65 = por %p63, %p64
    %s67 = sadd.s32 %s66, 1
    %p70 = scmp.eq.s32.totalorder %s11, 1
    %p71 = scmp.ne.s32.totalorder %s66, %s68
    %p72 = scmp.eq.s32.totalorder %s11, 0
    %p73 = por %p71, %p72
    %p74 = scmp.ne.s32.totalorder %s66, %s68
    %p75 = scmp.eq.s32.totalorder %s16, 1
    %p76 = por %p74, %p75
    %p77 = scmp.ne.s32.totalorder %s68, %s69
    %p78 = scmp.eq.s32.totalorder %s16, 0
    %p79 = por %p77, %p78
    %p80 = scmp.ne.s32.totalorder %s68, %s69
    %p81 = scmp.eq.s32.totalorder %s17, 1
    %p82 = por %p80, %p81
    %p84 = scmp.ne.s32.totalorder %s69, %s83
    %p85 = scmp.eq.s32.totalorder %s17, 0
    %p86 = por %p84, %p85
    %s88 = sadd.s32 %s87, 1
    %p91 = scmp.eq.s32.totalorder %s11, 1
    %p92 = scmp.ne.s32.totalorder %s87, %s89
    %p93 = scmp.eq.s32.totalorder %s11, 0
    %p94 = por %p92, %p93
    %p95 = scmp.ne.s32.totalorder %s87, %s89
    %p96 = scmp.eq.s32.totalorder %s16, 1
    %p97 = por %p95, %p96
    %p98 = scmp.ne.s32.totalorder %s89, %s90
    %p99 = scmp.eq.s32.totalorder %s16, 0
    %p100 = por %p98, %p99
    %p101 = scmp.ne.s32.totalorder %s89, %s90
    %p102 = scmp.eq.s32.totalorder %s17, 1
    %p103 = por %p101, %p102
    %p105 = scmp.ne.s32.totalorder %s90, %s104
    %p106 = scmp.eq.s32.totalorder %s17, 0
    %p107 = por %p105, %p106
    %s109 = sadd.s32 %s108, 1
    %p112 = scmp.eq.s32.totalorder %s11, 1
    %p113 = scmp.ne.s32.totalorder %s108, %s110
    %p114 = scmp.eq.s32.totalorder %s11, 0
    %p115 = por %p113, %p114
    %p116 = scmp.ne.s32.totalorder %s108, %s110
    %p117 = scmp.eq.s32.totalorder %s16, 1
    %p118 = por %p116, %p117
    %p119 = scmp.ne.s32.totalorder %s110, %s111
    %p120 = scmp.eq.s32.totalorder %s16, 0
    %p121 = por %p119, %p120
    %p122 = scmp.ne.s32.totalorder %s110, %s111
    %p123 = scmp.eq.s32.totalorder %s17, 1
    %p124 = por %p122, %p123
    %p126 = scmp.ne.s32.totalorder %s111, %s125
    %p127 = scmp.eq.s32.totalorder %s17, 0
    %p128 = por %p126, %p127
    %s129 = ssub.s32 %s11, %s18
    %p130 = scmp.eq.s32.totalorder %s129, 0
    %s132 = sadd.s32 %s131, 1
    %s133 = scalar_select %p130, %s131, %s132
    %p136 = pneg %p130
    %p137 = scmp.eq.s32.totalorder %s11, 1
    %p138 = por %p136, %p137
    %p139 = scmp.ne.s32.totalorder %s131, %s134
    %p140 = scmp.eq.s32.totalorder %s11, 0
    %p141 = por %p139, %p140
    %p142 = scmp.ne.s32.totalorder %s131, %s134
    %p143 = scmp.eq.s32.totalorder %s16, 1
    %p144 = por %p142, %p143
    %p145 = scmp.ne.s32.totalorder %s134, %s135
    %p146 = scmp.eq.s32.totalorder %s16, 0
    %p147 = por %p145, %p146
    %p148 = scmp.ne.s32.totalorder %s134, %s135
    %p149 = scmp.eq.s32.totalorder %s17, 1
    %p150 = por %p148, %p149
    %p152 = scmp.ne.s32.totalorder %s135, %s151
    %p153 = scmp.eq.s32.totalorder %s17, 0
    %p154 = por %p152, %p153
    %p155 = scmp.le.s32.totalorder 1, %s11
    %p156 = scmp.lt.s32.totalorder %s11, 3
    %p157 = pnand %p155, %p156
    %p158 = pneg %p157
    // Predicated region
    $region9: #{tpu_custom_call.1} parent=5 // pred_check
      _
    $region10: #{tpu_custom_call.1} parent=5 // pred_check_branch
      %160 = sbr.rel (%p157) target = $region12
    $region11: #{tpu_custom_call.1} parent=5 // pred_region
      %s161 = ssub.s32 %s11, 1
      // Predicated region
      $region13: #{tpu_custom_call.1} parent=11 // pred_check
        %p162 = pneg %p58
      $region14: #{tpu_custom_call.1} parent=11 // pred_check_branch
        %164 = sbr.rel (%p162) target = $region16
      $region15: #{tpu_custom_call.1} parent=11 // pred_region
        _
      $region16: #{tpu_custom_call.1} parent=11 // pred_fallthru
        _
      // Predicated region
      $region17: #{tpu_custom_call.1} parent=11 // pred_check
        %p165 = pneg %p79
      $region18: #{tpu_custom_call.1} parent=11 // pred_check_branch
        %167 = sbr.rel (%p165) target = $region20
      $region19: #{tpu_custom_call.1} parent=11 // pred_region
        _
      $region20: #{tpu_custom_call.1} parent=11 // pred_fallthru
        _
      // Predicated region
      $region21: #{tpu_custom_call.1} parent=11 // pred_check
        %p168 = pneg %p100
      $region22: #{tpu_custom_call.1} parent=11 // pred_check_branch
        %170 = sbr.rel (%p168) target = $region24
      $region23: #{tpu_custom_call.1} parent=11 // pred_region
        _
      $region24: #{tpu_custom_call.1} parent=11 // pred_fallthru
        _
      // Predicated region
      $region25: #{tpu_custom_call.1} parent=11 // pred_check
        %p171 = pneg %p121
      $region26: #{tpu_custom_call.1} parent=11 // pred_check_branch
        %173 = sbr.rel (%p171) target = $region28
      $region27: #{tpu_custom_call.1} parent=11 // pred_region
        _
      $region28: #{tpu_custom_call.1} parent=11 // pred_fallthru
        _
    $region12: #{tpu_custom_call.1} parent=5 // pred_fallthru
      _
    %p174 = scmp.lt.s32.totalorder %s11, 2
    // Predicated region
    $region29: #{tpu_custom_call.1} parent=5 // pred_check
      %p175 = pneg %p174
    $region30: #{tpu_custom_call.1} parent=5 // pred_check_branch
      %177 = sbr.rel (%p175) target = $region32
    $region31: #{tpu_custom_call.1} parent=5 // pred_region
      // Predicated region
      $region33: #{tpu_custom_call.1} parent=31 // pred_check
        %p178 = pneg %p31
      $region34: #{tpu_custom_call.1} parent=31 // pred_check_branch
        %180 = sbr.rel (%p178) target = $region36
      $region35: #{tpu_custom_call.1} parent=31 // pred_region
        %p181 = scmp.lt.s32.totalorder %s11, 1
        %s182 = scalar_select %p181, %s11, 1
        %s183 = smul.addr %s182, 2
        %s184 = smul.addr %s183, 8
        %s185 = scalar_lea.vmem %s0, %s184
      $region36: #{tpu_custom_call.1} parent=31 // pred_fallthru
        _
    $region32: #{tpu_custom_call.1} parent=5 // pred_fallthru
      _
    %p186 = scmp.le.s32.totalorder 1, %s11
    %p187 = scmp.lt.s32.totalorder %s11, 3
    %p188 = pnand %p186, %p187
    %p189 = pneg %p188
    // Predicated region
    $region37: #{tpu_custom_call.1} parent=5 // pred_check
      _
    $region38: #{tpu_custom_call.1} parent=5 // pred_check_branch
      %191 = sbr.rel (%p188) target = $region40
    $region39: #{tpu_custom_call.1} parent=5 // pred_region
      %s192 = ssub.s32 %s11, 1
      %p193 = scmp.lt.s32.totalorder %s16, 1
      %s194 = scalar_select %p193, %s16, 1
      %s195 = smul.addr %s194, 2
      %s196 = smul.addr %s195, 8
      %s197 = scalar_lea.vmem %s0, %s196
      %p198 = pneg %p37
      %p199 = pneg %p34
      %p200 = pneg %p58
      %p201 = pneg %p55
      %p202 = pneg %p79
      %p203 = pneg %p76
      %p204 = pneg %p100
      %p205 = pneg %p97
      %p206 = pneg %p121
      %p207 = pneg %p118
      %p208 = pneg %p147
      %p209 = pneg %p144
      %p210 = scmp.lt.s32.totalorder %s16, 1
      %s211 = scalar_select %p210, %s16, 1
      %s212 = smul.addr %s211, 8
      %s213 = scalar_lea.vmem %s5, %s212
      %p214 = scmp.lt.s32.totalorder %s16, 1
      %s215 = scalar_select %p214, %s16, 1
      %s216 = smul.addr %s215, 2
      %s217 = smul.addr %s216, 8
      %s218 = scalar_lea.vmem %s0, %s217
      %p219 = scmp.lt.s32.totalorder %s16, 1
      %s220 = scalar_select %p219, %s16, 1
      %s221 = smul.addr %s220, 8
      %s222 = scalar_lea.vmem %s5, %s221
      %v224 = vld [vmem:[%s218] sm:$0xff]
      %v225 = vld [vmem:[%s218 + $0x8] sm:$0xff]
      %v226 = vpack.c.bf16 %v224, %v224
      %v227 = vpack.c.bf16 %v225, %v225
      %v228 = vld [vmem:[%s1] sm:$0xf]
      %v229 = vld [vmem:[%s1 + $0x4] sm:$0xf]
      %v230 = vld [vmem:[%s1 + $0x8] sm:$0xf]
      %v231 = vld [vmem:[%s1 + $0xc] sm:$0xf]
      %v232 = vld [vmem:[%s1 + $0x10] sm:$0xf]
      %v233 = vld [vmem:[%s1 + $0x14] sm:$0xf]
      %v234 = vld [vmem:[%s1 + $0x18] sm:$0xf]
      %v235 = vld [vmem:[%s1 + $0x1c] sm:$0xf]
      %v236 = vld [vmem:[%s1 + $0x20] sm:$0xf]
      %v237 = vld [vmem:[%s1 + $0x24] sm:$0xf]
      %v238 = vld [vmem:[%s1 + $0x28] sm:$0xf]
      %v239 = vld [vmem:[%s1 + $0x2c] sm:$0xf]
      %v240 = vld [vmem:[%s1 + $0x30] sm:$0xf]
      %v241 = vld [vmem:[%s1 + $0x34] sm:$0xf]
      %v242 = vld [vmem:[%s1 + $0x38] sm:$0xf]
      %v243 = vld [vmem:[%s1 + $0x3c] sm:$0xf]
      %v244 = vld [vmem:[%s1 + $0x40] sm:$0xf]
      %v245 = vld [vmem:[%s1 + $0x44] sm:$0xf]
      %v246 = vld [vmem:[%s1 + $0x48] sm:$0xf]
      %v247 = vld [vmem:[%s1 + $0x4c] sm:$0xf]
      %v248 = vld [vmem:[%s1 + $0x50] sm:$0xf]
      %v249 = vld [vmem:[%s1 + $0x54] sm:$0xf]
      %v250 = vld [vmem:[%s1 + $0x58] sm:$0xf]
      %v251 = vld [vmem:[%s1 + $0x5c] sm:$0xf]
      %v252 = vld [vmem:[%s1 + $0x60] sm:$0xf]
      %v253 = vld [vmem:[%s1 + $0x64] sm:$0xf]
      %v254 = vld [vmem:[%s1 + $0x68] sm:$0xf]
      %v255 = vld [vmem:[%s1 + $0x6c] sm:$0xf]
      %v256 = vld [vmem:[%s1 + $0x70] sm:$0xf]
      %v257 = vld [vmem:[%s1 + $0x74] sm:$0xf]
      %v258 = vld [vmem:[%s1 + $0x78] sm:$0xf]
      %v259 = vld [vmem:[%s1 + $0x7c] sm:$0xf]
      %v260 = vld [vmem:[%s2] sm:$0x1]
      %v262 = vlaneseq
      %v263 = vshrl.u32 %v262, 7
      %v264 = vsub.s32 0, %v263
      %v265 = vrot.slane %v260, %v264
      %v299 = vunpack.c.l.b16 %v228
      %v300 = vunpack.c.l.b16 %v229
      %v301 = vunpack.c.l.b16 %v230
      %v302 = vunpack.c.l.b16 %v231
      %v303 = vunpack.c.l.b16 %v232
      %v304 = vunpack.c.l.b16 %v233
      %v305 = vunpack.c.l.b16 %v234
      %v306 = vunpack.c.l.b16 %v235
      %v307 = vunpack.c.l.b16 %v236
      %v308 = vunpack.c.l.b16 %v237
      %v309 = vunpack.c.l.b16 %v238
      %v310 = vunpack.c.l.b16 %v239
      %v311 = vunpack.c.l.b16 %v240
      %v312 = vunpack.c.l.b16 %v241
      %v313 = vunpack.c.l.b16 %v242
      %v314 = vunpack.c.l.b16 %v243
      %v315 = vunpack.c.l.b16 %v244
      %v316 = vunpack.c.l.b16 %v245
      %v317 = vunpack.c.l.b16 %v246
      %v318 = vunpack.c.l.b16 %v247
      %v319 = vunpack.c.l.b16 %v248
      %v320 = vunpack.c.l.b16 %v249
      %v321 = vunpack.c.l.b16 %v250
      %v322 = vunpack.c.l.b16 %v251
      %v323 = vunpack.c.l.b16 %v252
      %v324 = vunpack.c.l.b16 %v253
      %v325 = vunpack.c.l.b16 %v254
      %v326 = vunpack.c.l.b16 %v255
      %v327 = vunpack.c.l.b16 %v256
      %v328 = vunpack.c.l.b16 %v257
      %v329 = vunpack.c.l.b16 %v258
      %v330 = vunpack.c.l.b16 %v259
      %v331 = vpack.c.b16 %v300, %v299
      %v332 = vpack.c.b16 %v302, %v301
      %v333 = vpack.c.b16 %v304, %v303
      %v334 = vpack.c.b16 %v306, %v305
      %v335 = vpack.c.b16 %v308, %v307
      %v336 = vpack.c.b16 %v310, %v309
      %v337 = vpack.c.b16 %v312, %v311
      %v338 = vpack.c.b16 %v314, %v313
      %v339 = vpack.c.b16 %v316, %v315
      %v340 = vpack.c.b16 %v318, %v317
      %v341 = vpack.c.b16 %v320, %v319
      %v342 = vpack.c.b16 %v322, %v321
      %v343 = vpack.c.b16 %v324, %v323
      %v344 = vpack.c.b16 %v326, %v325
      %v345 = vpack.c.b16 %v328, %v327
      %v346 = vpack.c.b16 %v330, %v329
      %363 = vmatprep.subr.bf16.mxu0 0
      %364 = vmatpush1.bf16.msra.mxu0 %v338
      %365 = vmatprep.subr.bf16.mxu0 0
      %366 = vmatpush1.bf16.msra.mxu0 %v337
      %367 = vmatprep.subr.bf16.mxu0 0
      %368 = vmatpush1.bf16.msra.mxu0 %v336
      %369 = vmatprep.subr.bf16.mxu0 0
      %370 = vmatpush1.bf16.msra.mxu0 %v335
      %371 = vmatprep.subr.bf16.mxu0 0
      %372 = vmatpush1.bf16.msra.mxu0 %v334
      %373 = vmatprep.subr.bf16.mxu0 0
      %374 = vmatpush1.bf16.msra.mxu0 %v333
      %375 = vmatprep.subr.bf16.mxu0 0
      %376 = vmatpush1.bf16.msra.mxu0 %v332
      %377 = vmatprep.subr.bf16.mxu0 0
      %378 = vmatpush1.bf16.msra.mxu0 %v331
      %379 = vmatprep.subr.bf16.mxu0 0
      %380 = vmatpush2.bf16.msra.mxu0 %v346
      %381 = vmatprep.subr.bf16.mxu0 0
      %382 = vmatpush2.bf16.msra.mxu0 %v345
      %383 = vmatprep.subr.bf16.mxu0 0
      %384 = vmatpush2.bf16.msra.mxu0 %v344
      %385 = vmatprep.subr.bf16.mxu0 0
      %386 = vmatpush2.bf16.msra.mxu0 %v343
      %387 = vmatprep.subr.bf16.mxu0 0
      %388 = vmatpush2.bf16.msra.mxu0 %v342
      %389 = vmatprep.subr.bf16.mxu0 0
      %390 = vmatpush2.bf16.msra.mxu0 %v341
      %391 = vmatprep.subr.bf16.mxu0 0
      %392 = vmatpush2.bf16.msra.mxu0 %v340
      %393 = vmatprep.subr.bf16.mxu0 0
      %394 = vmatpush2.bf16.msra.mxu0 %v339
      %395 = vmatprep.mubr.bf16.mxu0 %v227
      %396 = vmatmul.mubr.bf16.gmra.mxu0 %v226
      %v397 = vpop.f32.mrf.mxu0
      %v398 = vadd.f32 %v265, %v397
      %v399 = vpop.f32.mrf.mxu0
      %v400 = vpop.f32.mrf.mxu0
      %v401 = vpop.f32.mrf.mxu0
      %402 = vdwg.mxu0
      %v403 = vmax.f32 %v398, 0.0
      %v404 = vpack.c.bf16 %v403, %v403
      %v405 = vld [vmem:[%s3] sm:$0xf]
      %v406 = vld [vmem:[%s3 + $0x4] sm:$0xf]
      %v407 = vld [vmem:[%s3 + $0x8] sm:$0xf]
      %v408 = vld [vmem:[%s3 + $0xc] sm:$0xf]
      %v409 = vld [vmem:[%s3 + $0x10] sm:$0xf]
      %v410 = vld [vmem:[%s3 + $0x14] sm:$0xf]
      %v411 = vld [vmem:[%s3 + $0x18] sm:$0xf]
      %v412 = vld [vmem:[%s3 + $0x1c] sm:$0xf]
      %v413 = vld [vmem:[%s4] sm:$0x1]
      %v415 = vlaneseq
      %v416 = vshrl.u32 %v415, 7
      %v417 = vsub.s32 0, %v416
      %v418 = vrot.slane %v413, %v417
      %v428 = vunpack.c.l.b16 %v405
      %v429 = vunpack.c.l.b16 %v406
      %v430 = vunpack.c.l.b16 %v407
      %v431 = vunpack.c.l.b16 %v408
      %v432 = vunpack.c.l.b16 %v409
      %v433 = vunpack.c.l.b16 %v410
      %v434 = vunpack.c.l.b16 %v411
      %v435 = vunpack.c.l.b16 %v412
      %v436 = vpack.c.b16 %v429, %v428
      %v437 = vpack.c.b16 %v431, %v430
      %v438 = vpack.c.b16 %v433, %v432
      %v439 = vpack.c.b16 %v435, %v434
      %vm444 = vcmask 523264
      %v446 = vsel %vm444, %v404, 0
      %448 = vmatprep.subr.bf16.mxu0 0
      %449 = vmatpush1.bf16.msra.mxu0 0
      %450 = vmatprep.subr.bf16.mxu0 0
      %451 = vmatpush1.bf16.msra.mxu0 0
      %452 = vmatprep.subr.bf16.mxu0 0
      %453 = vmatpush1.bf16.msra.mxu0 0
      %454 = vmatprep.subr.bf16.mxu0 0
      %455 = vmatpush1.bf16.msra.mxu0 0
      %456 = vmatprep.subr.bf16.mxu0 0
      %457 = vmatpush1.bf16.msra.mxu0 %v439
      %458 = vmatprep.subr.bf16.mxu0 0
      %459 = vmatpush1.bf16.msra.mxu0 %v438
      %460 = vmatprep.subr.bf16.mxu0 0
      %461 = vmatpush1.bf16.msra.mxu0 %v437
      %462 = vmatprep.subr.bf16.mxu0 0
      %463 = vmatpush1.bf16.msra.mxu0 %v436
      %464 = vmatprep.subr.bf16.mxu0 0
      %465 = vmatpush2.bf16.msra.mxu0 0
      %466 = vmatprep.subr.bf16.mxu0 0
      %467 = vmatpush2.bf16.msra.mxu0 0
      %468 = vmatprep.subr.bf16.mxu0 0
      %469 = vmatpush2.bf16.msra.mxu0 0
      %470 = vmatprep.subr.bf16.mxu0 0
      %471 = vmatpush2.bf16.msra.mxu0 0
      %472 = vmatprep.subr.bf16.mxu0 0
      %473 = vmatpush2.bf16.msra.mxu0 0
      %474 = vmatprep.subr.bf16.mxu0 0
      %475 = vmatpush2.bf16.msra.mxu0 0
      %476 = vmatprep.subr.bf16.mxu0 0
      %477 = vmatpush2.bf16.msra.mxu0 0
      %478 = vmatprep.subr.bf16.mxu0 0
      %479 = vmatpush2.bf16.msra.mxu0 0
      %480 = vmatprep.mubr.bf16.mxu0 0
      %481 = vmatmul.mubr.bf16.gmra.mxu0 %v446
      %v482 = vpop.f32.mrf.mxu0
      %v483 = vadd.f32 %v418, %v482
      %v484 = vpop.f32.mrf.mxu0
      %v485 = vpop.f32.mrf.mxu0
      %v486 = vpop.f32.mrf.mxu0
      %487 = vdwg.mxu0
      %vm488 = vcmask 31744
      %v489 = vsel %vm488, %v483, -inf
      %490 = vmax.xlane.f32.xlu0 %v489
      %v491 = vpop.xlane.xlu0 %490
      %v492 = vsub.f32 %v483, %v491
      %v493 = vmul.f32 %v492, 1.442695
      %v494 = vpow.pop %v493
      %v495 = vsel %vm488, %v494, 0.0
      %496 = vadd.xlane.f32.xlu0 %v495
      %v497 = vpop.xlane.xlu0 %496
      %v498 = vlog2.pop %v497
      %v499 = vmul.f32 %v498, 0.6931472
      %v500 = vsub.f32 %v492, %v499
      %501 = vst.msk [vmem:[%s222] sm:$0xff] %vm488, %v500
      %p502 = scmp.lt.s32.totalorder %s16, 1
      %s503 = scalar_select %p502, %s16, 1
      %s504 = smul.addr %s503, 8
      %s505 = scalar_lea.vmem %s5, %s504
      // Predicated region
      $region41: #{tpu_custom_call.1} parent=39 // pred_check
        %p506 = pneg %p144
      $region42: #{tpu_custom_call.1} parent=39 // pred_check_branch
        %508 = sbr.rel (%p506) target = $region44
      $region43: #{tpu_custom_call.1} parent=39 // pred_region
        _
      $region44: #{tpu_custom_call.1} parent=39 // pred_fallthru
        _
    $region40: #{tpu_custom_call.1} parent=5 // pred_fallthru
      _
    %p509 = scmp.le.s32.totalorder 2, %s11
    // Predicated region
    $region45: #{tpu_custom_call.1} parent=5 // pred_check
      %p510 = pneg %p509
    $region46: #{tpu_custom_call.1} parent=5 // pred_check_branch
      %512 = sbr.rel (%p510) target = $region48
    $region47: #{tpu_custom_call.1} parent=5 // pred_region
      %s513 = ssub.s32 %s11, 2
      // Predicated region
      $region49: #{tpu_custom_call.1} parent=47 // pred_check
        %p514 = pneg %p150
      $region50: #{tpu_custom_call.1} parent=47 // pred_check_branch
        %516 = sbr.rel (%p514) target = $region52
      $region51: #{tpu_custom_call.1} parent=47 // pred_region
        %p517 = scmp.lt.s32.totalorder %s17, 1
        %s518 = scalar_select %p517, %s17, 1
        %s519 = smul.addr %s518, 8
        %s520 = scalar_lea.vmem %s5, %s519
      $region52: #{tpu_custom_call.1} parent=47 // pred_fallthru
        _
    $region48: #{tpu_custom_call.1} parent=5 // pred_fallthru
      _
  $region6: #{tpu_custom_call.1} parent=0 // loop_footer
    %s15 = sadd.s32 1, %s11
  $region7: #{tpu_custom_call.1} parent=0 // loop_footer_branch
    %10 = sbr.rel target = $region3
  $region8: #{tpu_custom_call.1} parent=0 // loop_exit
    _

</llo_original>
